<compile_context>
chip_gen: v5e
topology: v5e:2x2
jax: 0.10.0
libtpu: 0.0.40
codegen_flags: <defaults>
</compile_context>

<pallas_src>
import functools

import jax
import jax.numpy as jnp
from jax.experimental import pallas as pl
from jax.experimental.pallas import tpu as pltpu


def _round_up(x, m):
    return ((x + m - 1) // m) * m


def _pick_batch_tile(batch):
    """Large tile (amortize ~0.35us/step overhead) but keep >=2 grid steps
    when the batch allows so both v7x TensorCores get work."""
    if batch <= 8:
        return 8
    return min(512, _round_up(max(batch // 2, 8), 8))


def _actor_kernel(x_ref, w1_ref, b1_ref, w2_ref, b2_ref, w3_ref, b3_ref, o_ref,
                  *, scale, shift):
    # Whole MLP hot path on one batch tile. Weights may be bf16; activations are
    # cast to the weight dtype before each MXU matmul, accumulation stays f32.
    wdt = w1_ref.dtype
    x = x_ref[...].astype(wdt)
    h1 = jnp.dot(x, w1_ref[...], preferred_element_type=jnp.float32) + b1_ref[...]
    h1 = jnp.maximum(h1, 0.0).astype(wdt)
    h2 = jnp.dot(h1, w2_ref[...], preferred_element_type=jnp.float32) + b2_ref[...]
    h2 = jnp.maximum(h2, 0.0).astype(wdt)
    y = jnp.dot(h2, w3_ref[...], preferred_element_type=jnp.float32) + b3_ref[...]
    # Folded affine: (tanh(y)+1)/2*(max-min)+min == tanh(y)*scale + shift
    o_ref[...] = jnp.tanh(y) * scale + shift


def prepare_actor_params(params, *, param_dtype=jnp.bfloat16):
    """One-time padding + dtype cast of the weights (do NOT redo per call)."""
    w1, b1, w2, b2, w3, b3 = params
    n_states, h1 = w1.shape
    h2 = w2.shape[1]
    n_actions = w3.shape[1]

    ns_pad = _round_up(n_states, 8)      # contiguous, lane-friendly input rows
    na_pad = _round_up(n_actions, 128)   # lane-dense output slab

    w1p = jnp.zeros((ns_pad, h1), param_dtype).at[:n_states, :].set(
        w1.astype(param_dtype))
    w2p = w2.astype(param_dtype)
    w3p = jnp.zeros((h2, na_pad), param_dtype).at[:, :n_actions].set(
        w3.astype(param_dtype))
    b1p = b1.astype(jnp.float32).reshape(1, h1)
    b2p = b2.astype(jnp.float32).reshape(1, h2)
    b3p = jnp.zeros((1, na_pad), jnp.float32).at[:, :n_actions].set(
        b3.astype(jnp.float32).reshape(1, n_actions))

    meta = dict(n_states=n_states, n_actions=n_actions,
                ns_pad=ns_pad, na_pad=na_pad, h1=h1, h2=h2)
    return (w1p, b1p, w2p, b2p, w3p, b3p), meta


def actor_forward(states, prepared, meta, *, bid_min, bid_max, batch_tile=None):
    """states: (B, n_states) float32. Returns (B, n_actions) float32."""
    w1, b1, w2, b2, w3, b3 = prepared
    B, n_states = states.shape
    assert n_states == meta["n_states"]
    ns_pad, na_pad = meta["ns_pad"], meta["na_pad"]
    h1, h2 = meta["h1"], meta["h2"]
    n_actions = meta["n_actions"]

    if batch_tile is None:
        batch_tile = _pick_batch_tile(B)
    batch_tile = max(8, _round_up(batch_tile, 8))
    B_pad = _round_up(B, batch_tile)

    x = states.astype(jnp.float32)
    if B_pad != B or ns_pad != n_states:
        x = jnp.pad(x, ((0, B_pad - B), (0, ns_pad - n_states)))

    scale = 0.5 * (bid_max - bid_min)
    shift = bid_min + scale
    kernel = functools.partial(_actor_kernel, scale=float(scale), shift=float(shift))

    grid = (B_pad // batch_tile,)
    # Tile only the batch axis; weights/biases are resident (constant block 0,0).
    in_specs = [
        pl.BlockSpec((batch_tile, ns_pad), lambda i: (i, 0)),
        pl.BlockSpec((ns_pad, h1), lambda i: (0, 0)),
        pl.BlockSpec((1, h1), lambda i: (0, 0)),
        pl.BlockSpec((h1, h2), lambda i: (0, 0)),
        pl.BlockSpec((1, h2), lambda i: (0, 0)),
        pl.BlockSpec((h2, na_pad), lambda i: (0, 0)),
        pl.BlockSpec((1, na_pad), lambda i: (0, 0)),
    ]
    out_spec = pl.BlockSpec((batch_tile, na_pad), lambda i: (i, 0))

    flops = 2 * B_pad * (ns_pad * h1 + h1 * h2 + h2 * na_pad)
    bytes_accessed = int(
        x.size * x.dtype.itemsize
        + sum(int(a.size) * a.dtype.itemsize for a in prepared)
        + B_pad * na_pad * 4)
    cost = pl.CostEstimate(flops=flops,
                           transcendentals=B_pad * na_pad,
                           bytes_accessed=bytes_accessed)

    out = pl.pallas_call(
        kernel,
        out_shape=jax.ShapeDtypeStruct((B_pad, na_pad), jnp.float32),
        grid_spec=pltpu.PrefetchScalarGridSpec(
            num_scalar_prefetch=0,
            grid=grid,
            in_specs=in_specs,
            out_specs=out_spec,
        ),
        compiler_params=pltpu.CompilerParams(
            dimension_semantics=("parallel",)),
        cost_estimate=cost,
    )(x, w1, b1, w2, b2, w3, b3)

    return out[:B, :n_actions]


def xavier_uniform(key, fan_in, fan_out):
    # Matches torch.nn.init.xavier_uniform_ (gain=1): U(-a, a), a = sqrt(6/(fan_in+fan_out))
    a = jnp.sqrt(6.0 / (fan_in + fan_out))
    return jax.random.uniform(key, (fan_in, fan_out), jnp.float32, -a, a)


def init_actor_params(key, n_states=5, hidden1=200, hidden2=100, n_actions=1):
    k1, k2, k3 = jax.random.split(key, 3)
    w1 = xavier_uniform(k1, n_states, hidden1)
    b1 = jnp.zeros((1, hidden1), jnp.float32)
    w2 = xavier_uniform(k2, hidden1, hidden2)
    b2 = jnp.zeros((1, hidden2), jnp.float32)
    w3 = xavier_uniform(k3, hidden2, n_actions)
    b3 = jnp.zeros((1, n_actions), jnp.float32)
    return (w1, b1, w2, b2, w3, b3)


def actor_reference(states, params, *, bid_min, bid_max, param_dtype=jnp.float32):
    """Pure-JAX reference; param_dtype mirrors the kernel's weight dtype."""
    w1, b1, w2, b2, w3, b3 = params
    w1 = w1.astype(param_dtype)
    w2 = w2.astype(param_dtype)
    w3 = w3.astype(param_dtype)
    h1 = jnp.maximum(
        jnp.dot(states.astype(param_dtype), w1,
                preferred_element_type=jnp.float32) + b1, 0.0)
    h2 = jnp.maximum(
        jnp.dot(h1.astype(param_dtype), w2,
                preferred_element_type=jnp.float32) + b2, 0.0)
    y = jnp.tanh(
        jnp.dot(h2.astype(param_dtype), w3,
                preferred_element_type=jnp.float32) + b3)
    return (y + 1.0) / 2.0 * (bid_max - bid_min) + bid_min


if __name__ == "__main__":
    # Module config: value=3.0, constrain=True => bidMax = value; bidMin = 0.2
    value = 3.0
    bid_min = 0.2
    bid_max = value  # constrain=True path

    n_states, hidden1, hidden2, n_actions = 5, 200, 100, 1
    batch = 8

    key = jax.random.PRNGKey(0)
    kp, kx, ky = jax.random.split(key, 3)
    params = init_actor_params(kp, n_states, hidden1, hidden2, n_actions)
    states = jax.random.normal(kx, (batch, n_states), jnp.float32)

    # --- f32 weights: exact-path correctness check -------------------------
    prep_f32, meta = prepare_actor_params(params, param_dtype=jnp.float32)
    out_f32 = actor_forward(states, prep_f32, meta,
                            bid_min=bid_min, bid_max=bid_max)
    out_f32 = jax.block_until_ready(out_f32)
    ref_f32 = actor_reference(states, params, bid_min=bid_min, bid_max=bid_max)
    assert out_f32.shape == (batch, n_actions)
    assert jnp.allclose(out_f32, ref_f32, atol=1e-5, rtol=1e-5), "f32 mismatch"

    # --- bf16 weights (default perf path) ----------------------------------
    prep_bf16, meta_b = prepare_actor_params(params)  # bfloat16 weights
    out_bf16 = actor_forward(states, prep_bf16, meta_b,
                             bid_min=bid_min, bid_max=bid_max)
    out_bf16 = jax.block_until_ready(out_bf16)
    ref_bf16 = actor_reference(states, params, bid_min=bid_min, bid_max=bid_max,
                               param_dtype=jnp.bfloat16)
    assert jnp.allclose(out_bf16, ref_bf16, atol=2e-3, rtol=2e-3), "bf16 mismatch"
    assert jnp.allclose(out_bf16, ref_f32, atol=5e-2, rtol=5e-2), "bf16 drift"
    assert bool(jnp.all(out_bf16 >= bid_min - 1e-3))
    assert bool(jnp.all(out_bf16 <= bid_max + 1e-3))

    # --- ragged batch + multi-step grid (exercises batch padding / 2 tiles) -
    states24 = jax.random.normal(ky, (24, n_states), jnp.float32)
    out24 = actor_forward(states24, prep_f32, meta,
                          bid_min=bid_min, bid_max=bid_max)
    out24 = jax.block_until_ready(out24)
    ref24 = actor_reference(states24, params, bid_min=bid_min, bid_max=bid_max)
    assert out24.shape == (24, n_actions)
    assert jnp.allclose(out24, ref24, atol=1e-5, rtol=1e-5), "ragged mismatch"

    print("KERNEL_OK")
</pallas_src>

<mosaic_0001>
module attributes {stable_mosaic.version = 11 : i64} {
  func.func @_actor_kernel(%arg0: i32, %arg1: memref<8x8xf32, #tpu.memory_space<vmem>>, %arg2: memref<8x200xf32, #tpu.memory_space<vmem>>, %arg3: memref<1x200xf32, #tpu.memory_space<vmem>>, %arg4: memref<200x100xf32, #tpu.memory_space<vmem>>, %arg5: memref<1x100xf32, #tpu.memory_space<vmem>>, %arg6: memref<100x128xf32, #tpu.memory_space<vmem>>, %arg7: memref<1x128xf32, #tpu.memory_space<vmem>>, %arg8: memref<8x128xf32, #tpu.memory_space<vmem>>) attributes {dimension_semantics = [#tpu.dimension_semantics<parallel>], iteration_bounds = array<i64: 1>, scalar_prefetch = 0 : i64, scratch_operands = 0 : i64, tpu.core_type = #tpu.core_type<tc>, window_params = [{transform_indices = @transform_0, window_bounds = array<i64: 8, 8>}, {pipeline_mode = #tpu.pipeline_mode<synchronous>, transform_indices = @transform_1, window_bounds = array<i64: 8, 200>}, {pipeline_mode = #tpu.pipeline_mode<synchronous>, transform_indices = @transform_2, window_bounds = array<i64: 1, 200>}, {pipeline_mode = #tpu.pipeline_mode<synchronous>, transform_indices = @transform_3, window_bounds = array<i64: 200, 100>}, {pipeline_mode = #tpu.pipeline_mode<synchronous>, transform_indices = @transform_4, window_bounds = array<i64: 1, 100>}, {pipeline_mode = #tpu.pipeline_mode<synchronous>, transform_indices = @transform_5, window_bounds = array<i64: 100, 128>}, {pipeline_mode = #tpu.pipeline_mode<synchronous>, transform_indices = @transform_6, window_bounds = array<i64: 1, 128>}, {transform_indices = @transform_7, window_bounds = array<i64: 8, 128>}]} {
    %c0 = arith.constant 0 : index
    %c0_0 = arith.constant 0 : index
    %0 = vector.load %arg1[%c0, %c0_0] : memref<8x8xf32, #tpu.memory_space<vmem>>, vector<8x8xf32>
    %c0_1 = arith.constant 0 : index
    %c0_2 = arith.constant 0 : index
    %1 = vector.load %arg2[%c0_1, %c0_2] : memref<8x200xf32, #tpu.memory_space<vmem>>, vector<8x200xf32>
    %cst = arith.constant dense<0.000000e+00> : vector<8x200xf32>
    %2 = tpu.matmul %0, %1, %cst {dimension_numbers = #tpu.dot_dimension_numbers<[1], [0], [0], [1], [0, 0, 1, 1], [], []>} : vector<8x8xf32>, vector<8x200xf32>, vector<8x200xf32> -> vector<8x200xf32>
    %c0_3 = arith.constant 0 : index
    %c0_4 = arith.constant 0 : index
    %3 = vector.load %arg3[%c0_3, %c0_4] : memref<1x200xf32, #tpu.memory_space<vmem>>, vector<1x200xf32>
    %4 = vector.broadcast %3 : vector<1x200xf32> to vector<8x200xf32>
    %5 = arith.addf %2, %4 : vector<8x200xf32>
    %cst_5 = arith.constant 0.000000e+00 : f32
    %6 = vector.broadcast %cst_5 : f32 to vector<8x200xf32>
    %7 = arith.maximumf %5, %6 : vector<8x200xf32>
    %c0_6 = arith.constant 0 : index
    %c0_7 = arith.constant 0 : index
    %8 = vector.load %arg4[%c0_6, %c0_7] : memref<200x100xf32, #tpu.memory_space<vmem>>, vector<200x100xf32>
    %cst_8 = arith.constant dense<0.000000e+00> : vector<8x100xf32>
    %9 = tpu.matmul %7, %8, %cst_8 {dimension_numbers = #tpu.dot_dimension_numbers<[1], [0], [0], [1], [0, 0, 1, 1], [], []>} : vector<8x200xf32>, vector<200x100xf32>, vector<8x100xf32> -> vector<8x100xf32>
    %c0_9 = arith.constant 0 : index
    %c0_10 = arith.constant 0 : index
    %10 = vector.load %arg5[%c0_9, %c0_10] : memref<1x100xf32, #tpu.memory_space<vmem>>, vector<1x100xf32>
    %11 = vector.broadcast %10 : vector<1x100xf32> to vector<8x100xf32>
    %12 = arith.addf %9, %11 : vector<8x100xf32>
    %cst_11 = arith.constant 0.000000e+00 : f32
    %13 = vector.broadcast %cst_11 : f32 to vector<8x100xf32>
    %14 = arith.maximumf %12, %13 : vector<8x100xf32>
    %c0_12 = arith.constant 0 : index
    %c0_13 = arith.constant 0 : index
    %15 = vector.load %arg6[%c0_12, %c0_13] : memref<100x128xf32, #tpu.memory_space<vmem>>, vector<100x128xf32>
    %cst_14 = arith.constant dense<0.000000e+00> : vector<8x128xf32>
    %16 = tpu.matmul %14, %15, %cst_14 {dimension_numbers = #tpu.dot_dimension_numbers<[1], [0], [0], [1], [0, 0, 1, 1], [], []>} : vector<8x100xf32>, vector<100x128xf32>, vector<8x128xf32> -> vector<8x128xf32>
    %c0_15 = arith.constant 0 : index
    %c0_16 = arith.constant 0 : index
    %17 = vector.load %arg7[%c0_15, %c0_16] : memref<1x128xf32, #tpu.memory_space<vmem>>, vector<1x128xf32>
    %18 = vector.broadcast %17 : vector<1x128xf32> to vector<8x128xf32>
    %19 = arith.addf %16, %18 : vector<8x128xf32>
    %20 = math.tanh %19 : vector<8x128xf32>
    %cst_17 = arith.constant 1.400000e+00 : f32
    %21 = vector.broadcast %cst_17 : f32 to vector<8x128xf32>
    %22 = arith.mulf %20, %21 : vector<8x128xf32>
    %cst_18 = arith.constant 1.600000e+00 : f32
    %23 = vector.broadcast %cst_18 : f32 to vector<8x128xf32>
    %24 = arith.addf %22, %23 : vector<8x128xf32>
    %c0_19 = arith.constant 0 : index
    %c0_20 = arith.constant 0 : index
    %25 = vector.load %arg8[%c0_19, %c0_20] : memref<8x128xf32, #tpu.memory_space<vmem>>, vector<8x128xf32>
    tpu.vector_store %arg8[%c0_19, %c0_20], %24 {strides = array<i32>} : memref<8x128xf32, #tpu.memory_space<vmem>>, vector<8x128xf32>,
    return
  }
  func.func @transform_0(%arg0: i32) -> (i32, i32) {
    %c0_i32 = arith.constant 0 : i32
    %c0_i32_0 = arith.constant 0 : i32
    return %arg0, %c0_i32 : i32, i32
  }
  func.func @transform_1(%arg0: i32) -> (i32, i32) {
    %c0_i32 = arith.constant 0 : i32
    %c0_i32_0 = arith.constant 0 : i32
    %c0_i32_1 = arith.constant 0 : i32
    return %c0_i32, %c0_i32_0 : i32, i32
  }
  func.func @transform_2(%arg0: i32) -> (i32, i32) {
    %c0_i32 = arith.constant 0 : i32
    %c0_i32_0 = arith.constant 0 : i32
    %c0_i32_1 = arith.constant 0 : i32
    return %c0_i32, %c0_i32_0 : i32, i32
  }
  func.func @transform_3(%arg0: i32) -> (i32, i32) {
    %c0_i32 = arith.constant 0 : i32
    %c0_i32_0 = arith.constant 0 : i32
    %c0_i32_1 = arith.constant 0 : i32
    return %c0_i32, %c0_i32_0 : i32, i32
  }
  func.func @transform_4(%arg0: i32) -> (i32, i32) {
    %c0_i32 = arith.constant 0 : i32
    %c0_i32_0 = arith.constant 0 : i32
    %c0_i32_1 = arith.constant 0 : i32
    return %c0_i32, %c0_i32_0 : i32, i32
  }
  func.func @transform_5(%arg0: i32) -> (i32, i32) {
    %c0_i32 = arith.constant 0 : i32
    %c0_i32_0 = arith.constant 0 : i32
    %c0_i32_1 = arith.constant 0 : i32
    return %c0_i32, %c0_i32_0 : i32, i32
  }
  func.func @transform_6(%arg0: i32) -> (i32, i32) {
    %c0_i32 = arith.constant 0 : i32
    %c0_i32_0 = arith.constant 0 : i32
    %c0_i32_1 = arith.constant 0 : i32
    return %c0_i32, %c0_i32_0 : i32, i32
  }
  func.func @transform_7(%arg0: i32) -> (i32, i32) {
    %c0_i32 = arith.constant 0 : i32
    %c0_i32_0 = arith.constant 0 : i32
    return %arg0, %c0_i32 : i32, i32
  }
}

</mosaic_0001>

<llo_original>
// kernel: tpu_custom_call.1
$region0: #{tpu_custom_call.1}
  #allocation0 [shape = 'u32[]', space=smem, size = 0x4, offset = 0x4, fixed_abs, tag = 'smem constant byte address 0x4 - core index']
  #allocation1 [shape = 'u32[72,128]{1,0:T(1,128)}', space=vmem, size = 0x9000, scoped, tag = 'internal scratch']
  %s0 = inlined_call_operand.hbm [shape: f32[8,8], index: 0, kind: input, shape index: {}]
  %s1 = inlined_call_operand.hbm [shape: f32[8,200], index: 1, kind: input, shape index: {}]
  %s2 = inlined_call_operand.hbm [shape: f32[1,200], index: 2, kind: input, shape index: {}]
  %s3 = inlined_call_operand.hbm [shape: f32[200,100], index: 3, kind: input, shape index: {}]
  %s4 = inlined_call_operand.vmem [shape: f32[1,100], index: 4, kind: input, shape index: {}]
  %s5 = inlined_call_operand.hbm [shape: f32[100,128], index: 5, kind: input, shape index: {}]
  %s6 = inlined_call_operand.vmem [shape: f32[1,128], index: 6, kind: input, shape index: {}]
  %s7 = inlined_call_operand.hbm [shape: f32[8,128], index: 7, kind: output, shape index: {}]
  %s8 = sld [smem:[#allocation0]]
  $region58: #{tpu_custom_call.1} parent=0
    _
  %s10 = ssub.s32 1, %s8
  %s11 = scalar_select 0, %s10, %s8
  $region1: #{tpu_custom_call.1} parent=0
    #allocation2 [shape = 'u8[4096]{0}', space=vmem, size = 0x1000, scoped, tag = 'input window, operand 0, single buffered']
    #allocation3 [shape = 's32[1]{0}', space=sflag, size = 0x4, scoped, tag = 'scoped memory for tpu_custom_call.1']
    #allocation4 [shape = 's32[1]{0}', space=sflag, size = 0x4, scoped, tag = 'scoped memory for tpu_custom_call.1']
    #allocation5 [shape = 'u8[8192]{0}', space=vmem, size = 0x2000, scoped, tag = 'input window, operand 1, single buffered']
    #allocation6 [shape = 's32[1]{0}', space=sflag, size = 0x4, scoped, tag = 'scoped memory for tpu_custom_call.1']
    #allocation7 [shape = 'u8[1024]{0}', space=vmem, size = 0x400, scoped, tag = 'input window, operand 2, single buffered']
    #allocation8 [shape = 'u8[102400]{0}', space=vmem, size = 0x19000, scoped, tag = 'input window, operand 3, single buffered']
    #allocation9 [shape = 's32[1]{0}', space=sflag, size = 0x4, scoped, tag = 'scoped memory for tpu_custom_call.1']
    #allocation10 [shape = 'u8[53248]{0}', space=vmem, size = 0xd000, scoped, tag = 'input window, operand 5, single buffered']
    #allocation11 [shape = 'u8[4096]{0}', space=vmem, size = 0x1000, scoped, tag = 'output window, operand 0, single buffered']
    %12 = vsyncpa [#allocation3], 0
    %13 = vsyncpa [#allocation6], 0
    %14 = vsyncpa [#allocation9], 0
    %15 = vsyncpa [#allocation4], 0
    // Predicated region
    $region2: #{tpu_custom_call.1} parent=1 // pred_check
      _
    $region3: #{tpu_custom_call.1} parent=1 // pred_check_branch
      %17 = sbr.rel (0) target = $region5
    $region4: #{tpu_custom_call.1} parent=1 // pred_region
      %19 = vsyncadd [#allocation3], 0
      %s21 = sshll.u32 %s0, 4
      %s22 = int_to_ptr.hbm [resolvable:$true] %s21
      %s23 = sshll.u32 [#allocation2], 4
      %s24 = int_to_ptr.vmem [resolvable:$true] %s23
      %26 = dma.hbm_to_vmem [thread:$0]  %s22, 128, %s24, [#allocation3]
    $region5: #{tpu_custom_call.1} parent=1 // pred_fallthru
      _
    // Predicated region
    $region6: #{tpu_custom_call.1} parent=1 // pred_check
      _
    $region7: #{tpu_custom_call.1} parent=1 // pred_check_branch
      %28 = sbr.rel (0) target = $region9
    $region8: #{tpu_custom_call.1} parent=1 // pred_region
      %30 = vsyncadd [#allocation6], 0
      %s32 = sshll.u32 %s1, 4
      %s33 = int_to_ptr.hbm [resolvable:$true] %s32
      %s34 = sshll.u32 [#allocation5], 4
      %s35 = int_to_ptr.vmem [resolvable:$true] %s34
      %37 = dma.hbm_to_vmem [thread:$0]  %s33, 256, %s35, [#allocation6]
    $region9: #{tpu_custom_call.1} parent=1 // pred_fallthru
      _
    // Predicated region
    $region10: #{tpu_custom_call.1} parent=1 // pred_check
      _
    $region11: #{tpu_custom_call.1} parent=1 // pred_check_branch
      %39 = sbr.rel (0) target = $region13
    $region12: #{tpu_custom_call.1} parent=1 // pred_region
      %41 = vsyncadd [#allocation6], 0
      %s43 = sshll.u32 %s2, 4
      %s44 = int_to_ptr.hbm [resolvable:$true] %s43
      %s45 = sshll.u32 [#allocation7], 4
      %s46 = int_to_ptr.vmem [resolvable:$true] %s45
      %48 = dma.hbm_to_vmem [thread:$0]  %s44, 32, %s46, [#allocation6]
    $region13: #{tpu_custom_call.1} parent=1 // pred_fallthru
      _
    // Predicated region
    $region14: #{tpu_custom_call.1} parent=1 // pred_check
      _
    $region15: #{tpu_custom_call.1} parent=1 // pred_check_branch
      %50 = sbr.rel (0) target = $region17
    $region16: #{tpu_custom_call.1} parent=1 // pred_region
      %52 = vsyncadd [#allocation9], 0
      %s53 = sshll.u32 %s3, 4
      %s54 = int_to_ptr.hbm [resolvable:$true] %s53
      %s55 = sshll.u32 [#allocation8], 4
      %s56 = int_to_ptr.vmem [resolvable:$true] %s55
      %61 = dma.hbm_to_vmem [thread:$0]  %s54, 3200, %s56, [#allocation9], 128, 128, 8
    $region17: #{tpu_custom_call.1} parent=1 // pred_fallthru
      _
    // Predicated region
    $region18: #{tpu_custom_call.1} parent=1 // pred_check
      _
    $region19: #{tpu_custom_call.1} parent=1 // pred_check_branch
      %63 = sbr.rel (0) target = $region21
    $region20: #{tpu_custom_call.1} parent=1 // pred_region
      _
    $region21: #{tpu_custom_call.1} parent=1 // pred_fallthru
      _
    // Predicated region
    $region22: #{tpu_custom_call.1} parent=1 // pred_check
      _
    $region23: #{tpu_custom_call.1} parent=1 // pred_check_branch
      %65 = sbr.rel (0) target = $region25
    $region24: #{tpu_custom_call.1} parent=1 // pred_region
      %67 = vsyncadd [#allocation9], 0
      %s68 = sshll.u32 %s5, 4
      %s69 = int_to_ptr.hbm [resolvable:$true] %s68
      %s70 = sshll.u32 [#allocation10], 4
      %s71 = int_to_ptr.vmem [resolvable:$true] %s70
      %76 = dma.hbm_to_vmem [thread:$0]  %s69, 1664, %s71, [#allocation9], 128, 128, 8
    $region25: #{tpu_custom_call.1} parent=1 // pred_fallthru
      _
    // Predicated region
    $region26: #{tpu_custom_call.1} parent=1 // pred_check
      _
    $region27: #{tpu_custom_call.1} parent=1 // pred_check_branch
      %78 = sbr.rel (0) target = $region29
    $region28: #{tpu_custom_call.1} parent=1 // pred_region
      _
    $region29: #{tpu_custom_call.1} parent=1 // pred_fallthru
      _
    // Predicated region
    $region30: #{tpu_custom_call.1} parent=1 // pred_check
      _
    $region31: #{tpu_custom_call.1} parent=1 // pred_check_branch
      %80 = sbr.rel (0) target = $region33
    $region32: #{tpu_custom_call.1} parent=1 // pred_region
      %82 = dma.done [#allocation3], 128
    $region33: #{tpu_custom_call.1} parent=1 // pred_fallthru
      _
    // Predicated region
    $region34: #{tpu_custom_call.1} parent=1 // pred_check
      _
    $region35: #{tpu_custom_call.1} parent=1 // pred_check_branch
      %84 = sbr.rel (0) target = $region37
    $region36: #{tpu_custom_call.1} parent=1 // pred_region
      %86 = dma.done [#allocation6], 256
    $region37: #{tpu_custom_call.1} parent=1 // pred_fallthru
      _
    // Predicated region
    $region38: #{tpu_custom_call.1} parent=1 // pred_check
      _
    $region39: #{tpu_custom_call.1} parent=1 // pred_check_branch
      %88 = sbr.rel (0) target = $region41
    $region40: #{tpu_custom_call.1} parent=1 // pred_region
      %90 = dma.done [#allocation6], 32
    $region41: #{tpu_custom_call.1} parent=1 // pred_fallthru
      _
    // Predicated region
    $region42: #{tpu_custom_call.1} parent=1 // pred_check
      _
    $region43: #{tpu_custom_call.1} parent=1 // pred_check_branch
      %92 = sbr.rel (0) target = $region45
    $region44: #{tpu_custom_call.1} parent=1 // pred_region
      %94 = dma.done [#allocation9], 3200
    $region45: #{tpu_custom_call.1} parent=1 // pred_fallthru
      _
    // Predicated region
    $region46: #{tpu_custom_call.1} parent=1 // pred_check
      _
    $region47: #{tpu_custom_call.1} parent=1 // pred_check_branch
      %96 = sbr.rel (0) target = $region49
    $region48: #{tpu_custom_call.1} parent=1 // pred_region
      %98 = dma.done [#allocation9], 1664
    $region49: #{tpu_custom_call.1} parent=1 // pred_fallthru
      _
    %v99 = vld [vmem:[#allocation2] sm:$0xff]
    %v100 = vld [vmem:[#allocation5] sm:$0xff]
    %v101 = vld [vmem:[#allocation5 + $0x8] sm:$0xff]
    %v102 = vld [vmem:[#allocation7] sm:$0x3]
    %v104 = vperm.slane %v102, 0
    %v105 = vperm.slane %v102, 1
    %vm108 = vcmask 64512
    %v110 = vsel %vm108, %v99, 0
    %112 = vmatpush.msra.mxu0 0.0
    %113 = vmatpush.msra.mxu0 0.0
    %114 = vmatpush.msra.mxu0 0.0
    %115 = vmatpush.msra.mxu0 0.0
    %116 = vmatpush.msra.mxu0 0.0
    %117 = vmatpush.msra.mxu0 0.0
    %118 = vmatpush.msra.mxu0 0.0
    %119 = vmatpush.msra.mxu0 0.0
    %120 = vmatpush.msra.mxu0 0.0
    %121 = vmatpush.msra.mxu0 0.0
    %122 = vmatpush.msra.mxu0 0.0
    %123 = vmatpush.msra.mxu0 0.0
    %124 = vmatpush.msra.mxu0 0.0
    %125 = vmatpush.msra.mxu0 0.0
    %126 = vmatpush.msra.mxu0 0.0
    %127 = vmatpush.msra.mxu0 %v100
    %128 = vmatmul.f32.gmra.mxu0 %v110
    %v129 = vpop.f32.mrf.mxu0
    %v130 = vadd.f32 %v104, %v129
    %131 = vdwg.mxu0
    %132 = vmatpush.msra.mxu0 0.0
    %133 = vmatpush.msra.mxu0 0.0
    %134 = vmatpush.msra.mxu0 0.0
    %135 = vmatpush.msra.mxu0 0.0
    %136 = vmatpush.msra.mxu0 0.0
    %137 = vmatpush.msra.mxu0 0.0
    %138 = vmatpush.msra.mxu0 0.0
    %139 = vmatpush.msra.mxu0 0.0
    %140 = vmatpush.msra.mxu0 0.0
    %141 = vmatpush.msra.mxu0 0.0
    %142 = vmatpush.msra.mxu0 0.0
    %143 = vmatpush.msra.mxu0 0.0
    %144 = vmatpush.msra.mxu0 0.0
    %145 = vmatpush.msra.mxu0 0.0
    %146 = vmatpush.msra.mxu0 0.0
    %147 = vmatpush.msra.mxu0 %v101
    %148 = vmatmul.f32.gmra.mxu0 %v110
    %v149 = vpop.f32.mrf.mxu0
    %v150 = vadd.f32 %v105, %v149
    %151 = vdwg.mxu0
    %v152 = vmax.f32 %v130, 0.0
    %v153 = vmax.f32 %v150, 0.0
    %v154 = vld [vmem:[#allocation8] sm:$0xff]
    %v155 = vld [vmem:[#allocation8 + $0x8] sm:$0xff]
    %v156 = vld [vmem:[#allocation8 + $0x10] sm:$0xff]
    %v157 = vld [vmem:[#allocation8 + $0x18] sm:$0xff]
    %v158 = vld [vmem:[#allocation8 + $0x20] sm:$0xff]
    %v159 = vld [vmem:[#allocation8 + $0x28] sm:$0xff]
    %v160 = vld [vmem:[#allocation8 + $0x30] sm:$0xff]
    %v161 = vld [vmem:[#allocation8 + $0x38] sm:$0xff]
    %v162 = vld [vmem:[#allocation8 + $0x40] sm:$0xff]
    %v163 = vld [vmem:[#allocation8 + $0x48] sm:$0xff]
    %v164 = vld [vmem:[#allocation8 + $0x50] sm:$0xff]
    %v165 = vld [vmem:[#allocation8 + $0x58] sm:$0xff]
    %v166 = vld [vmem:[#allocation8 + $0x60] sm:$0xff]
    %v167 = vld [vmem:[#allocation8 + $0x68] sm:$0xff]
    %v168 = vld [vmem:[#allocation8 + $0x70] sm:$0xff]
    %v169 = vld [vmem:[#allocation8 + $0x78] sm:$0xff]
    %v170 = vld [vmem:[#allocation8 + $0x80] sm:$0xff]
    %v171 = vld [vmem:[#allocation8 + $0x88] sm:$0xff]
    %v172 = vld [vmem:[#allocation8 + $0x90] sm:$0xff]
    %v173 = vld [vmem:[#allocation8 + $0x98] sm:$0xff]
    %v174 = vld [vmem:[#allocation8 + $0xa0] sm:$0xff]
    %v175 = vld [vmem:[#allocation8 + $0xa8] sm:$0xff]
    %v176 = vld [vmem:[#allocation8 + $0xb0] sm:$0xff]
    %v177 = vld [vmem:[#allocation8 + $0xb8] sm:$0xff]
    %v178 = vld [vmem:[#allocation8 + $0xc0] sm:$0xff]
    %v179 = vld [vmem:[%s4] sm:$0x1]
    %v181 = vperm.slane %v179, 0
    %vm183 = vcmask 588800
    %v185 = vsel %vm183, %v153, 0
    %187 = vmatpush.msra.mxu0 %v169
    %188 = vmatpush.msra.mxu0 %v168
    %189 = vmatpush.msra.mxu0 %v167
    %190 = vmatpush.msra.mxu0 %v166
    %191 = vmatpush.msra.mxu0 %v165
    %192 = vmatpush.msra.mxu0 %v164
    %193 = vmatpush.msra.mxu0 %v163
    %194 = vmatpush.msra.mxu0 %v162
    %195 = vmatpush.msra.mxu0 %v161
    %196 = vmatpush.msra.mxu0 %v160
    %197 = vmatpush.msra.mxu0 %v159
    %198 = vmatpush.msra.mxu0 %v158
    %199 = vmatpush.msra.mxu0 %v157
    %200 = vmatpush.msra.mxu0 %v156
    %201 = vmatpush.msra.mxu0 %v155
    %202 = vmatpush.msra.mxu0 %v154
    %203 = vmatmul.f32.gmra.mxu0 %v152
    %v204 = vpop.f32.mrf.mxu0
    %v205 = vadd.f32 %v181, %v204
    %206 = vdwg.mxu0
    %207 = vmatpush.msra.mxu0 0.0
    %208 = vmatpush.msra.mxu0 0.0
    %209 = vmatpush.msra.mxu0 0.0
    %210 = vmatpush.msra.mxu0 0.0
    %211 = vmatpush.msra.mxu0 0.0
    %212 = vmatpush.msra.mxu0 0.0
    %213 = vmatpush.msra.mxu0 0.0
    %214 = vmatpush.msra.mxu0 %v178
    %215 = vmatpush.msra.mxu0 %v177
    %216 = vmatpush.msra.mxu0 %v176
    %217 = vmatpush.msra.mxu0 %v175
    %218 = vmatpush.msra.mxu0 %v174
    %219 = vmatpush.msra.mxu0 %v173
    %220 = vmatpush.msra.mxu0 %v172
    %221 = vmatpush.msra.mxu0 %v171
    %222 = vmatpush.msra.mxu0 %v170
    %223 = vmatmul.f32.gmra.mxu0 %v185
    %v224 = vpop.f32.mrf.mxu0
    %v225 = vadd.f32 %v205, %v224
    %226 = vdwg.mxu0
    %v227 = vmax.f32 %v225, 0.0
    %v228 = vld [vmem:[#allocation10] sm:$0xff]
    %v229 = vld [vmem:[#allocation10 + $0x8] sm:$0xff]
    %v230 = vld [vmem:[#allocation10 + $0x10] sm:$0xff]
    %v231 = vld [vmem:[#allocation10 + $0x18] sm:$0xff]
    %v232 = vld [vmem:[#allocation10 + $0x20] sm:$0xff]
    %v233 = vld [vmem:[#allocation10 + $0x28] sm:$0xff]
    %v234 = vld [vmem:[#allocation10 + $0x30] sm:$0xff]
    %v235 = vld [vmem:[#allocation10 + $0x38] sm:$0xff]
    %v236 = vld [vmem:[#allocation10 + $0x40] sm:$0xff]
    %v237 = vld [vmem:[#allocation10 + $0x48] sm:$0xff]
    %v238 = vld [vmem:[#allocation10 + $0x50] sm:$0xff]
    %v239 = vld [vmem:[#allocation10 + $0x58] sm:$0xff]
    %v240 = vld [vmem:[#allocation10 + $0x60] sm:$0xf]
    %v241 = vld [vmem:[%s6] sm:$0x1]
    %v243 = vperm.slane %v241, 0
    %vm245 = vcmask 818176
    %v247 = vsel %vm245, %v227, 0
    %vm249 = vcmask 1043456
    %v251 = vsel %vm249, %v240, 0
    %253 = vmatpush.msra.mxu0 0.0
    %254 = vmatpush.msra.mxu0 0.0
    %255 = vmatpush.msra.mxu0 0.0
    %256 = vmatpush.msra.mxu0 %v251
    %257 = vmatpush.msra.mxu0 %v239
    %258 = vmatpush.msra.mxu0 %v238
    %259 = vmatpush.msra.mxu0 %v237
    %260 = vmatpush.msra.mxu0 %v236
    %261 = vmatpush.msra.mxu0 %v235
    %262 = vmatpush.msra.mxu0 %v234
    %263 = vmatpush.msra.mxu0 %v233
    %264 = vmatpush.msra.mxu0 %v232
    %265 = vmatpush.msra.mxu0 %v231
    %266 = vmatpush.msra.mxu0 %v230
    %267 = vmatpush.msra.mxu0 %v229
    %268 = vmatpush.msra.mxu0 %v228
    %269 = vmatmul.f32.gmra.mxu0 %v247
    %v270 = vpop.f32.mrf.mxu0
    %v271 = vadd.f32 %v243, %v270
    %272 = vdwg.mxu0
    %v273 = vtanh.pop %v271
    %v274 = vmul.f32 %v273, 1.4
    %v275 = vadd.f32 %v274, 1.6
    %276 = vst [vmem:[#allocation11] sm:$0xff] %v275
    // Predicated region
    $region50: #{tpu_custom_call.1} parent=1 // pred_check
      _
    $region51: #{tpu_custom_call.1} parent=1 // pred_check_branch
      %278 = sbr.rel (0) target = $region53
    $region52: #{tpu_custom_call.1} parent=1 // pred_region
      %280 = vsyncadd [#allocation4], 0
      %s282 = sshll.u32 [#allocation11], 4
      %s283 = int_to_ptr.vmem [resolvable:$true] %s282
      %s284 = sshll.u32 %s7, 4
      %s285 = int_to_ptr.hbm [resolvable:$true] %s284
      %287 = dma.vmem_to_hbm [thread:$0]  %s283, 128, %s285, [#allocation4]
    $region53: #{tpu_custom_call.1} parent=1 // pred_fallthru
      _
    // Predicated region
    $region54: #{tpu_custom_call.1} parent=1 // pred_check
      _
    $region55: #{tpu_custom_call.1} parent=1 // pred_check_branch
      %289 = sbr.rel (0) target = $region57
    $region56: #{tpu_custom_call.1} parent=1 // pred_region
      %291 = dma.done [#allocation4], 128
    $region57: #{tpu_custom_call.1} parent=1 // pred_fallthru
      _
    %292 = vsyncpa [#allocation3], 1
    %293 = vsyncpa [#allocation6], 1
    %294 = vsyncpa [#allocation9], 1
    %295 = vsyncpa [#allocation4], 1

</llo_original>
